<compile_context>
chip_gen: v7x
topology: tpu7x:2x2x1
jax: 0.10.0
libtpu: 0.0.40
codegen_flags: <defaults>
</compile_context>

<pallas_src>
import math
from functools import partial

import jax
import jax.numpy as jnp
from jax.experimental import pallas as pl
from jax.experimental.pallas import tpu as pltpu


def _round_up(x, m):
    return (x + m - 1) // m * m


def _cdiv(a, b):
    return -(-a // b)


def _vmem_limit(need_bytes):
    """Honest VMEM budget, clamped under physical VMEM (v7x = 64 MiB)."""
    try:
        phys = getattr(pltpu.get_tpu_info(), "vmem_capacity_bytes", 64 << 20)
    except Exception:  # pragma: no cover - conservative fallback
        phys = 64 << 20
    hi = max(phys - (8 << 20), 16 << 20)
    return int(min(max(need_bytes + (4 << 20), 16 << 20), hi))


# --------------------------- kernels ---------------------------------------
def _pointwise_kernel(x_ref, w_ref, b_ref, o_ref):
    # x_ref: (tm, C_in)   w_ref: (C_in, tn)   b_ref: (1, tn) f32   o_ref: (tm, tn)
    acc = jnp.dot(x_ref[...], w_ref[...], preferred_element_type=jnp.float32)
    o_ref[...] = (acc + b_ref[...]).astype(o_ref.dtype)


def _conv1d_kernel(x_hbm, w_ref, b_ref, o_ref, xbuf, sem, *, dilation):
    # x_hbm: (B, T_in_p, C_in) raw HBM ref (memory_space=ANY)
    # w_ref: (K, C_in, C_out_p) resident VMEM block
    # b_ref: (1, C_out_p) f32
    # o_ref: (1, tile, C_out_p) lane-dense output tile
    # xbuf : (2, tile_in, C_in) VMEM double buffer, sem: DMA sems (2,)
    bi = pl.program_id(0)
    ti = pl.program_id(1)
    n_t = pl.num_programs(1)

    tile = o_ref.shape[1]
    tile_in = xbuf.shape[1]
    c_out_p = o_ref.shape[2]
    k_size = w_ref.shape[0]

    def dma(t_idx, slot):
        start = pl.multiple_of(t_idx * tile, 8)
        return pltpu.make_async_copy(
            x_hbm.at[bi, pl.ds(start, tile_in), :], xbuf.at[slot], sem.at[slot])

    slot = ti % 2

    @pl.when(ti == 0)
    def _():
        dma(ti, slot).start()          # prime the first tile of this batch row

    dma(ti, slot).wait()               # wait for this tile's halo block

    @pl.when(ti + 1 < n_t)
    def _():
        dma(ti + 1, (ti + 1) % 2).start()   # prefetch next tile (overlap w/ compute)

    acc = jnp.zeros((tile, c_out_p), jnp.float32)
    for k in range(k_size):            # static unroll: K MXU matmuls, f32 accumulate
        xs = xbuf[slot, pl.ds(k * dilation, tile), :]      # (tile, C_in)
        acc = acc + jnp.dot(xs, w_ref[k], preferred_element_type=jnp.float32)
    o_ref[0] = (acc + b_ref[...]).astype(o_ref.dtype)


# --------------------------- wrapper ----------------------------------------
def conv1d_channels_last(x, weight, bias=None, *, stride=1, padding=0,
                         dilation=1, t_tile=256):
    """Forward of the PyTorch `Conv` module (transpose -> Conv1d -> transpose), fused.

    x:      (B, T, C_in)  channels-last input, as the module receives it.
    weight: (K, C_in, C_out)  == torch conv.weight (C_out, C_in, K) transposed.
    bias:   (C_out,) or None.
    """
    if stride != 1:
        # TODO(synk): strided conv not implemented (module default is stride=1).
        raise NotImplementedError("stride > 1 not implemented")

    B, T, C_in = x.shape
    K, wc_in, C_out = weight.shape
    assert wc_in == C_in
    T_out = T + 2 * padding - dilation * (K - 1)
    assert T_out > 0

    dtype = x.dtype
    itemsize = jnp.dtype(dtype).itemsize
    sub = max(8, 32 // max(itemsize, 1))           # sublane packing: 8 f32 / 16 bf16
    c_out_p = _round_up(C_out, 128)                # lane-dense output stores

    w = weight.astype(dtype)
    b = (jnp.zeros((C_out,), jnp.float32) if bias is None
         else bias.astype(jnp.float32))
    if c_out_p != C_out:
        w = jnp.pad(w, ((0, 0), (0, 0), (0, c_out_p - C_out)))
        b = jnp.pad(b, ((0, c_out_p - C_out),))
    b = b.reshape(1, c_out_p)

    # ---- Fast path: pointwise conv (module default kernel_size=1) ----------
    if K == 1 and padding == 0:
        M = B * T
        x2 = x.reshape(M, C_in)
        w2 = w[0]                                          # (C_in, c_out_p)
        tm = min(_round_up(t_tile, sub), _round_up(M, sub))
        tn = min(c_out_p, 512)
        grid = (_cdiv(M, tm), _cdiv(c_out_p, tn))
        need = itemsize * 2 * (tm * C_in + C_in * tn + tm * tn) + 4 * 2 * tn
        out = pl.pallas_call(
            _pointwise_kernel,
            out_shape=jax.ShapeDtypeStruct((M, c_out_p), dtype),
            grid=grid,
            in_specs=[
                pl.BlockSpec((tm, C_in), lambda i, j: (i, 0)),
                pl.BlockSpec((C_in, tn), lambda i, j: (0, j)),
                pl.BlockSpec((1, tn), lambda i, j: (0, j)),
            ],
            out_specs=pl.BlockSpec((tm, tn), lambda i, j: (i, j)),
            compiler_params=pltpu.CompilerParams(
                dimension_semantics=("parallel", "parallel"),
                vmem_limit_bytes=_vmem_limit(need),
            ),
        )(x2, w2, b)
        out = out.reshape(B, T, c_out_p)
        return out if c_out_p == C_out else out[..., :C_out]

    # ---- General path: K taps, halo-tiled time, manual double-buffered DMA --
    tile = min(_round_up(t_tile, sub), _round_up(T_out, sub))
    n_t = _cdiv(T_out, tile)
    halo = _round_up(dilation * (K - 1), sub) if K > 1 else 0
    tile_in = tile + halo
    T_in_p = (n_t - 1) * tile + tile_in
    # Single pad, in the ORIGINAL dtype: conv left pad + tile/halo right pad.
    x_pad = jnp.pad(x, ((0, 0), (padding, T_in_p - T - padding), (0, 0)))

    # TODO(synk): for very large K*C_in*C_out (>= several MiB) add a C_out grid
    # axis so the weight block is tiled instead of fully resident.
    need = (itemsize * (2 * K * C_in * c_out_p          # weight (double-buffered)
                        + 2 * tile * c_out_p            # output tile
                        + 2 * tile_in * C_in)           # input halo double buffer
            + 4 * 2 * c_out_p)                          # bias (f32)

    out = pl.pallas_call(
        partial(_conv1d_kernel, dilation=dilation),
        out_shape=jax.ShapeDtypeStruct((B, T_out, c_out_p), dtype),
        grid=(B, n_t),
        in_specs=[
            pl.BlockSpec(memory_space=pl.ANY),                          # x stays in HBM
            pl.BlockSpec((K, C_in, c_out_p), lambda bi, ti: (0, 0, 0)),  # resident weight
            pl.BlockSpec((1, c_out_p), lambda bi, ti: (0, 0)),           # bias
        ],
        out_specs=pl.BlockSpec((1, tile, c_out_p), lambda bi, ti: (bi, ti, 0)),
        scratch_shapes=[
            pltpu.VMEM((2, tile_in, C_in), dtype),      # input halo double buffer
            pltpu.SemaphoreType.DMA((2,)),
        ],
        compiler_params=pltpu.CompilerParams(
            dimension_semantics=("parallel", "arbitrary"),
            vmem_limit_bytes=_vmem_limit(need),
        ),
    )(x_pad, w, b)
    return out if c_out_p == C_out else out[..., :C_out]


# ---------------- pure-JAX reference (same math) -----------------------------
def _reference(x, w, b, *, padding, dilation):
    B, T, C_in = x.shape
    K, _, C_out = w.shape
    T_out = T + 2 * padding - dilation * (K - 1)
    xp = jnp.pad(x.astype(jnp.float32), ((0, 0), (padding, padding), (0, 0)))
    out = jnp.zeros((B, T_out, C_out), jnp.float32)
    for k in range(K):
        out = out + jnp.einsum(
            'btc,cd->btd', xp[:, k * dilation:k * dilation + T_out, :],
            w[k].astype(jnp.float32))
    return out + b.astype(jnp.float32)[None, None, :]


if __name__ == "__main__":
    key = jax.random.PRNGKey(0)
    k1, k2, k3, k4, k5 = jax.random.split(key, 5)

    B, T, C_in, C_out = 2, 16, 32, 32
    x = jax.random.normal(k1, (B, T, C_in), jnp.float32)

    # ---- Config 1: module defaults (kernel_size=1, padding=0, bias=True) ----
    K1 = 1
    bound = math.sqrt(6.0 / (C_in + C_out))               # xavier-style init
    w1 = jax.random.uniform(k2, (K1, C_in, C_out), jnp.float32, -bound, bound)
    b1 = jax.random.uniform(k3, (C_out,), jnp.float32, -0.1, 0.1)
    out1 = jax.block_until_ready(conv1d_channels_last(x, w1, b1, padding=0))
    ref1 = _reference(x, w1, b1, padding=0, dilation=1)
    assert out1.shape == ref1.shape == (B, T, C_out)
    assert out1.dtype == x.dtype
    assert jnp.allclose(out1, ref1, atol=1e-4, rtol=1e-4), "config1 mismatch"

    # ---- Config 2: kernel_size=3, padding=1 (typical use of this wrapper) ----
    K2 = 3
    bound = math.sqrt(6.0 / (C_in * K2 + C_out * K2))
    w2 = jax.random.uniform(k4, (K2, C_in, C_out), jnp.float32, -bound, bound)
    b2 = jax.random.uniform(k5, (C_out,), jnp.float32, -0.1, 0.1)
    out2 = jax.block_until_ready(conv1d_channels_last(x, w2, b2, padding=1))
    ref2 = _reference(x, w2, b2, padding=1, dilation=1)
    assert out2.shape == ref2.shape == (B, T, C_out)
    assert jnp.allclose(out2, ref2, atol=1e-4, rtol=1e-4), "config2 mismatch"

    # ---- Config 3: bf16 activations/weights (no f32 upcast inside the kernel) ----
    xb = x.astype(jnp.bfloat16)
    wb = w2.astype(jnp.bfloat16)
    out3 = jax.block_until_ready(conv1d_channels_last(xb, wb, b2, padding=1))
    ref3 = _reference(xb.astype(jnp.float32), wb.astype(jnp.float32), b2,
                      padding=1, dilation=1)
    assert out3.shape == (B, T, C_out) and out3.dtype == jnp.bfloat16
    assert jnp.allclose(out3.astype(jnp.float32), ref3, atol=5e-2, rtol=5e-2), \
        "config3 (bf16) mismatch"

    print("KERNEL_OK")
</pallas_src>

<mosaic_0001>
module attributes {stable_mosaic.version = 11 : i64} {
  func.func @_pointwise_kernel(%arg0: i32, %arg1: i32, %arg2: memref<32x32xf32, #tpu.memory_space<vmem>>, %arg3: memref<32x128xf32, #tpu.memory_space<vmem>>, %arg4: memref<1x128xf32, #tpu.memory_space<vmem>>, %arg5: memref<32x128xf32, #tpu.memory_space<vmem>>) attributes {dimension_semantics = [#tpu.dimension_semantics<parallel>, #tpu.dimension_semantics<parallel>], iteration_bounds = array<i64: 1, 1>, scalar_prefetch = 0 : i64, scratch_operands = 0 : i64, tpu.core_type = #tpu.core_type<tc>, window_params = [{transform_indices = @transform_0, window_bounds = array<i64: 32, 32>}, {transform_indices = @transform_1, window_bounds = array<i64: 32, 128>}, {transform_indices = @transform_2, window_bounds = array<i64: 1, 128>}, {transform_indices = @transform_3, window_bounds = array<i64: 32, 128>}]} {
    %c0 = arith.constant 0 : index
    %c0_0 = arith.constant 0 : index
    %0 = vector.load %arg2[%c0, %c0_0] : memref<32x32xf32, #tpu.memory_space<vmem>>, vector<32x32xf32>
    %c0_1 = arith.constant 0 : index
    %c0_2 = arith.constant 0 : index
    %1 = vector.load %arg3[%c0_1, %c0_2] : memref<32x128xf32, #tpu.memory_space<vmem>>, vector<32x128xf32>
    %cst = arith.constant dense<0.000000e+00> : vector<32x128xf32>
    %2 = tpu.matmul %0, %1, %cst {dimension_numbers = #tpu.dot_dimension_numbers<[1], [0], [0], [1], [0, 0, 1, 1], [], []>} : vector<32x32xf32>, vector<32x128xf32>, vector<32x128xf32> -> vector<32x128xf32>
    %c0_3 = arith.constant 0 : index
    %c0_4 = arith.constant 0 : index
    %3 = vector.load %arg4[%c0_3, %c0_4] : memref<1x128xf32, #tpu.memory_space<vmem>>, vector<1x128xf32>
    %4 = vector.broadcast %3 : vector<1x128xf32> to vector<32x128xf32>
    %5 = arith.addf %2, %4 : vector<32x128xf32>
    %c0_5 = arith.constant 0 : index
    %c0_6 = arith.constant 0 : index
    %6 = vector.load %arg5[%c0_5, %c0_6] : memref<32x128xf32, #tpu.memory_space<vmem>>, vector<32x128xf32>
    tpu.vector_store %arg5[%c0_5, %c0_6], %5 {strides = array<i32>} : memref<32x128xf32, #tpu.memory_space<vmem>>, vector<32x128xf32>,
    return
  }
  func.func @transform_0(%arg0: i32, %arg1: i32) -> (i32, i32) {
    %c0_i32 = arith.constant 0 : i32
    %c0_i32_0 = arith.constant 0 : i32
    return %arg0, %c0_i32 : i32, i32
  }
  func.func @transform_1(%arg0: i32, %arg1: i32) -> (i32, i32) {
    %c0_i32 = arith.constant 0 : i32
    %c0_i32_0 = arith.constant 0 : i32
    return %c0_i32, %arg1 : i32, i32
  }
  func.func @transform_2(%arg0: i32, %arg1: i32) -> (i32, i32) {
    %c0_i32 = arith.constant 0 : i32
    %c0_i32_0 = arith.constant 0 : i32
    return %c0_i32, %arg1 : i32, i32
  }
  func.func @transform_3(%arg0: i32, %arg1: i32) -> (i32, i32) {
    %c0_i32 = arith.constant 0 : i32
    return %arg0, %arg1 : i32, i32
  }
}

</mosaic_0001>

<llo_original>
// kernel: tpu_custom_call.1
$region0: #{tpu_custom_call.1}
  #allocation0 [shape = 'u32[]', space=smem, size = 0x4, offset = 0x4, fixed_abs, tag = 'smem constant byte address 0x4 - core index']
  #allocation1 [shape = 'u32[144,128]{1,0:T(1,128)}', space=vmem, size = 0x12000, scoped, tag = 'internal scratch']
  %s0 = inlined_call_operand.hbm [shape: f32[32,32], index: 0, kind: input, shape index: {}]
  %s1 = inlined_call_operand.hbm [shape: f32[32,128], index: 1, kind: input, shape index: {}]
  %s2 = inlined_call_operand.vmem [shape: f32[1,128], index: 2, kind: input, shape index: {}]
  %s3 = inlined_call_operand.hbm [shape: f32[32,128], index: 3, kind: output, shape index: {}]
  %s4 = sld [smem:[#allocation0]]
  $region30: #{tpu_custom_call.1} parent=0
    _
  %s6 = ssub.s32 1, %s4
  %s7 = scalar_select 0, %s6, %s4
  $region1: #{tpu_custom_call.1} parent=0
    #allocation2 [shape = 'u8[16384]{0}', space=vmem, size = 0x4000, scoped, tag = 'input window, operand 0, single buffered']
    #allocation3 [shape = 's32[1]{0}', space=sflag, size = 0x4, scoped, tag = 'scoped memory for tpu_custom_call.1']
    #allocation4 [shape = 's32[1]{0}', space=sflag, size = 0x4, scoped, tag = 'scoped memory for tpu_custom_call.1']
    #allocation5 [shape = 'u8[16384]{0}', space=vmem, size = 0x4000, scoped, tag = 'input window, operand 1, single buffered']
    #allocation6 [shape = 's32[1]{0}', space=sflag, size = 0x4, scoped, tag = 'scoped memory for tpu_custom_call.1']
    #allocation7 [shape = 'u8[16384]{0}', space=vmem, size = 0x4000, scoped, tag = 'output window, operand 0, single buffered']
    %8 = vsyncpa [#allocation3], 0
    %9 = vsyncpa [#allocation6], 0
    %10 = vsyncpa [#allocation4], 0
    // Predicated region
    $region2: #{tpu_custom_call.1} parent=1 // pred_check
      _
    $region3: #{tpu_custom_call.1} parent=1 // pred_check_branch
      %12 = sbr.rel (0) target = $region5
    $region4: #{tpu_custom_call.1} parent=1 // pred_region
      %s14 = ssub.s32 512, 512
      %15 = vsyncadd [#allocation3], %s14
      %s16 = sshll.u32 [#allocation2], 4
      %s17 = int_to_ptr.vmem [resolvable:$true] %s16
      %22 = dma.hbm_to_vmem [thread:$0]  %s0, 512, %s17, [#allocation3], 128, 128, 8
    $region5: #{tpu_custom_call.1} parent=1 // pred_fallthru
      _
    // Predicated region
    $region6: #{tpu_custom_call.1} parent=1 // pred_check
      _
    $region7: #{tpu_custom_call.1} parent=1 // pred_check_branch
      %24 = sbr.rel (0) target = $region9
    $region8: #{tpu_custom_call.1} parent=1 // pred_region
      %s26 = ssub.s32 512, 512
      %27 = vsyncadd [#allocation6], %s26
      %s28 = sshll.u32 [#allocation5], 4
      %s29 = int_to_ptr.vmem [resolvable:$true] %s28
      %34 = dma.hbm_to_vmem [thread:$0]  %s1, 512, %s29, [#allocation6], 128, 128, 8
    $region9: #{tpu_custom_call.1} parent=1 // pred_fallthru
      _
    // Predicated region
    $region10: #{tpu_custom_call.1} parent=1 // pred_check
      _
    $region11: #{tpu_custom_call.1} parent=1 // pred_check_branch
      %36 = sbr.rel (0) target = $region13
    $region12: #{tpu_custom_call.1} parent=1 // pred_region
      _
    $region13: #{tpu_custom_call.1} parent=1 // pred_fallthru
      _
    // Predicated region
    $region14: #{tpu_custom_call.1} parent=1 // pred_check
      _
    $region15: #{tpu_custom_call.1} parent=1 // pred_check_branch
      %38 = sbr.rel (0) target = $region17
    $region16: #{tpu_custom_call.1} parent=1 // pred_region
      %39 = dma.done [#allocation3], 512
    $region17: #{tpu_custom_call.1} parent=1 // pred_fallthru
      _
    // Predicated region
    $region18: #{tpu_custom_call.1} parent=1 // pred_check
      _
    $region19: #{tpu_custom_call.1} parent=1 // pred_check_branch
      %41 = sbr.rel (0) target = $region21
    $region20: #{tpu_custom_call.1} parent=1 // pred_region
      %42 = dma.done [#allocation6], 512
    $region21: #{tpu_custom_call.1} parent=1 // pred_fallthru
      _
    %v43 = vld [vmem:[#allocation2] sm:$0xff]
    %v44 = vld [vmem:[#allocation2 + $0x8] sm:$0xff]
    %v45 = vld [vmem:[#allocation2 + $0x10] sm:$0xff]
    %v46 = vld [vmem:[#allocation2 + $0x18] sm:$0xff]
    %v47 = vld [vmem:[#allocation5] sm:$0xff]
    %v48 = vld [vmem:[#allocation5 + $0x8] sm:$0xff]
    %v49 = vld [vmem:[#allocation5 + $0x10] sm:$0xff]
    %v50 = vld [vmem:[#allocation5 + $0x18] sm:$0xff]
    %v51 = vld [vmem:[%s2] sm:$0x1]
    %v53 = vlaneseq
    %v54 = vshrl.u32 %v53, 7
    %v55 = vsub.s32 0, %v54
    %v56 = vrot.slane %v51, %v55
    %vm58 = vcmask 261120
    %v60 = vsel %vm58, %v43, 0
    %v63 = vsel %vm58, %v44, 0
    %v66 = vsel %vm58, %v45, 0
    %v69 = vsel %vm58, %v46, 0
    %71 = vmatprep.subr.mxu0 0.0
    %72 = vmatpush1.msra.mxu0 %v47
    %73 = vmatprep.subr.mxu0 0.0
    %74 = vmatpush1.msra.mxu0 %v48
    %75 = vmatprep.subr.mxu0 0.0
    %76 = vmatpush1.msra.mxu0 %v49
    %77 = vmatprep.subr.mxu0 0.0
    %78 = vmatpush1.msra.mxu0 %v50
    %79 = vmatprep.subr.mxu0 0.0
    %80 = vmatpush1.msra.mxu0 0.0
    %81 = vmatprep.subr.mxu0 0.0
    %82 = vmatpush1.msra.mxu0 0.0
    %83 = vmatprep.subr.mxu0 0.0
    %84 = vmatpush1.msra.mxu0 0.0
    %85 = vmatprep.subr.mxu0 0.0
    %86 = vmatpush1.msra.mxu0 0.0
    %87 = vmatprep.subr.mxu0 0.0
    %88 = vmatpush1.msra.mxu0 0.0
    %89 = vmatprep.subr.mxu0 0.0
    %90 = vmatpush1.msra.mxu0 0.0
    %91 = vmatprep.subr.mxu0 0.0
    %92 = vmatpush1.msra.mxu0 0.0
    %93 = vmatprep.subr.mxu0 0.0
    %94 = vmatpush1.msra.mxu0 0.0
    %95 = vmatprep.subr.mxu0 0.0
    %96 = vmatpush1.msra.mxu0 0.0
    %97 = vmatprep.subr.mxu0 0.0
    %98 = vmatpush1.msra.mxu0 0.0
    %99 = vmatprep.subr.mxu0 0.0
    %100 = vmatpush1.msra.mxu0 0.0
    %101 = vmatprep.subr.mxu0 0.0
    %102 = vmatpush1.msra.mxu0 0.0
    %103 = vmatprep.subr.mxu0 0.0
    %104 = vmatpush1.msra.mxu0 0.0
    %105 = vmatprep.subr.mxu0 0.0
    %106 = vmatpush1.msra.mxu0 0.0
    %107 = vmatprep.subr.mxu0 0.0
    %108 = vmatpush1.msra.mxu0 0.0
    %109 = vmatprep.subr.mxu0 0.0
    %110 = vmatpush1.msra.mxu0 0.0
    %111 = vmatprep.subr.mxu0 0.0
    %112 = vmatpush1.msra.mxu0 0.0
    %113 = vmatprep.subr.mxu0 0.0
    %114 = vmatpush1.msra.mxu0 0.0
    %115 = vmatprep.subr.mxu0 0.0
    %116 = vmatpush1.msra.mxu0 0.0
    %117 = vmatprep.subr.mxu0 0.0
    %118 = vmatpush1.msra.mxu0 0.0
    %119 = vmatprep.subr.mxu0 0.0
    %120 = vmatpush1.msra.mxu0 0.0
    %121 = vmatprep.subr.mxu0 0.0
    %122 = vmatpush1.msra.mxu0 0.0
    %123 = vmatprep.subr.mxu0 0.0
    %124 = vmatpush1.msra.mxu0 0.0
    %125 = vmatprep.subr.mxu0 0.0
    %126 = vmatpush1.msra.mxu0 0.0
    %127 = vmatprep.subr.mxu0 0.0
    %128 = vmatpush1.msra.mxu0 0.0
    %129 = vmatprep.subr.mxu0 0.0
    %130 = vmatpush1.msra.mxu0 0.0
    %131 = vmatprep.subr.mxu0 0.0
    %132 = vmatpush1.msra.mxu0 0.0
    %133 = vmatprep.subr.mxu0 0.0
    %134 = vmatpush1.msra.mxu0 0.0
    %135 = vmatprep.mubr.f32.mxu0 0.0
    %136 = vmatmul.mubr.f32.gmra.mrb[0].mxu0 %v60
    %v137 = vpop.f32.mrb[0].mxu0
    %v138 = vadd.f32 %v56, %v137
    %v139 = vpop.f32.mrb[0].mxu0
    %140 = vmatprep.mubr.f32.mxu0 0.0
    %141 = vmatmul.mubr.f32.gmra.mrb[0].mxu0 %v63
    %v142 = vpop.f32.mrb[0].mxu0
    %v143 = vadd.f32 %v56, %v142
    %v144 = vpop.f32.mrb[0].mxu0
    %145 = vmatprep.mubr.f32.mxu0 0.0
    %146 = vmatmul.mubr.f32.gmra.mrb[0].mxu0 %v66
    %v147 = vpop.f32.mrb[0].mxu0
    %v148 = vadd.f32 %v56, %v147
    %v149 = vpop.f32.mrb[0].mxu0
    %150 = vmatprep.mubr.f32.mxu0 0.0
    %151 = vmatmul.mubr.f32.gmra.mrb[0].mxu0 %v69
    %v152 = vpop.f32.mrb[0].mxu0
    %v153 = vadd.f32 %v56, %v152
    %v154 = vpop.f32.mrb[0].mxu0
    %155 = vdwg.mxu0
    %156 = vst [vmem:[#allocation7] sm:$0xff] %v138
    %157 = vst [vmem:[#allocation7 + $0x8] sm:$0xff] %v143
    %158 = vst [vmem:[#allocation7 + $0x10] sm:$0xff] %v148
    %159 = vst [vmem:[#allocation7 + $0x18] sm:$0xff] %v153
    // Predicated region
    $region22: #{tpu_custom_call.1} parent=1 // pred_check
      _
    $region23: #{tpu_custom_call.1} parent=1 // pred_check_branch
      %161 = sbr.rel (0) target = $region25
    $region24: #{tpu_custom_call.1} parent=1 // pred_region
      %s163 = ssub.s32 512, 512
      %164 = vsyncadd [#allocation4], %s163
      %s165 = sshll.u32 [#allocation7], 4
      %s166 = int_to_ptr.vmem [resolvable:$true] %s165
      %171 = dma.vmem_to_hbm [thread:$0]  %s166, 512, %s3, [#allocation4], 128, 128, 8
    $region25: #{tpu_custom_call.1} parent=1 // pred_fallthru
      _
    // Predicated region
    $region26: #{tpu_custom_call.1} parent=1 // pred_check
      _
    $region27: #{tpu_custom_call.1} parent=1 // pred_check_branch
      %173 = sbr.rel (0) target = $region29
    $region28: #{tpu_custom_call.1} parent=1 // pred_region
      %174 = dma.done [#allocation4], 512
    $region29: #{tpu_custom_call.1} parent=1 // pred_fallthru
      _
    %175 = vsyncpa [#allocation3], 1
    %176 = vsyncpa [#allocation6], 1
    %177 = vsyncpa [#allocation4], 1

</llo_original>
